<compile_context>
chip_gen: v6e
topology: v6e:2x2x1
jax: 0.10.0
libtpu: 0.0.40
codegen_flags: <defaults>
</compile_context>

<pallas_src>
import functools

import jax
import jax.numpy as jnp
from jax.experimental import pallas as pl
from jax.experimental.pallas import tpu as pltpu


def _round_up(x, m):
    return (x + m - 1) // m * m


def _vmem_capacity_bytes():
    try:
        info = pltpu.get_tpu_info()
        cap = getattr(info, "vmem_capacity_bytes", None)
        if cap:
            return int(cap)
    except Exception:
        pass
    return 64 * 2**20  # conservative fallback (v7x per-TensorCore VMEM)


_VMEM_CAP = _vmem_capacity_bytes()


def mlp_kernel(x_ref, w1_ref, b1_ref, w2_ref, b2_ref, o_ref):
    # x_ref:  (tm, d_model)      f32  (resident across the dff axis; cast to bf16 here)
    # w1_ref: (d_model, tdff)    bf16
    # b1_ref: (1, tdff)          f32
    # w2_ref: (tdff, d_model)    bf16
    # b2_ref: (1, d_model)       f32
    # o_ref:  (tm, d_model)      f32  (accumulator: resident across the dff axis)
    k = pl.program_id(1)

    @pl.when(k == 0)
    def _init():
        o_ref[...] = jnp.zeros_like(o_ref)

    x_bf16 = x_ref[...].astype(jnp.bfloat16)
    # First matmul on this dff slice (MXU, bf16 in / f32 acc) + bias.
    h = jnp.dot(x_bf16, w1_ref[...], preferred_element_type=jnp.float32)
    h = h + b1_ref[...]
    # Activation in f32; tanh-GELU lowers to the EUP slot.
    h = jax.nn.gelu(h, approximate=True)
    # Second matmul on this dff slice, accumulate directly into the output tile.
    o_ref[...] += jnp.dot(h.astype(w2_ref.dtype), w2_ref[...],
                          preferred_element_type=jnp.float32)

    @pl.when(k == pl.num_programs(1) - 1)
    def _finalize():
        # b2 added exactly once, on the last dff step.
        o_ref[...] += b2_ref[...]


def _weight_spec(block_shape, index_map, buffer_count):
    if buffer_count > 2:
        try:
            return pl.BlockSpec(block_shape, index_map,
                                pipeline_mode=pl.Buffered(buffer_count))
        except TypeError:  # older jax without pipeline_mode — fall back to default
            pass
    return pl.BlockSpec(block_shape, index_map)


@functools.partial(jax.jit, static_argnames=("tm", "tdff"))
def mlp_forward(x, w1, b1, w2, b2, *, tm=None, tdff=512):
    """x: (batch, seq, d_model) float32. Weights stored transposed vs. PyTorch:
    w1 (d_model, dff), w2 (dff, d_model) — ideally already bf16 (cast once by the
    caller). Returns (batch, seq, d_model) float32."""
    batch, seq, d_model = x.shape
    dff = w1.shape[1]
    n = batch * seq

    vmem_budget = int(_VMEM_CAP * 0.9) - (2 << 20)  # headroom below physical capacity

    # ---------------- dff tiling ----------------
    dff128 = _round_up(dff, 128)
    # Weights-resident path: full bf16 W1 + W2 (double-buffered, conservatively) fit.
    resident_bytes = 2 * (2 * d_model * dff128 * 2)
    if resident_bytes <= vmem_budget // 2:
        tdff_eff = dff128
    else:
        tdff_eff = max(128, min(_round_up(tdff, 256), dff128))
    dff_pad = _round_up(dff, tdff_eff)

    # ---------------- row tiling ----------------
    n16 = _round_up(n, 16)  # bf16 sublane packing
    if tm is None:
        tm_target = 1024 if _VMEM_CAP >= 96 * 2**20 else 512
    else:
        tm_target = max(16, _round_up(tm, 16))
    tm_eff = min(tm_target, n16)
    if tm_eff >= 256:
        tm_eff = (tm_eff // 256) * 256            # full-MXU row tiles
    if n16 <= tm_eff and n16 >= 512:
        # Split large single-tile inputs so both TensorCores (v7x) get a row tile.
        tm_eff = _round_up((n16 + 1) // 2, 256)

    num_k = dff_pad // tdff_eff
    stream_weights = num_k > 1
    w_bufs = 3 if (stream_weights and _VMEM_CAP >= 96 * 2**20) else 2

    def vmem_estimate(tm_e, tdff_e, bufs):
        return (2 * tm_e * d_model * 4             # x tile, f32, double-buffered
                + bufs * d_model * tdff_e * 2      # W1 tiles, bf16
                + 2 * tdff_e * 4                   # b1 tiles
                + bufs * tdff_e * d_model * 2      # W2 tiles, bf16
                + 2 * d_model * 4                  # b2 tile
                + 2 * tm_e * d_model * 4           # out tile (accumulator), f32
                + tm_e * tdff_e * 4                # h (f32)
                + tm_e * tdff_e * 2                # h cast to bf16
                + tm_e * tdff_e * 4                # GELU temporaries
                + (1 << 20))                       # Mosaic internal scratch margin

    # Shrink tm if the estimate overflows the budget.
    while tm_eff > 16 and vmem_estimate(tm_eff, tdff_eff, w_bufs) > vmem_budget:
        if tm_eff > 256:
            tm_eff -= 256
        else:
            tm_eff = max(16, _round_up(tm_eff // 2, 16))
    # If still over budget, fall back to a smaller dff tile.
    if vmem_estimate(tm_eff, tdff_eff, w_bufs) > vmem_budget and tdff_eff > 256:
        tdff_eff = 256
        dff_pad = _round_up(dff, tdff_eff)
        num_k = dff_pad // tdff_eff
        stream_weights = num_k > 1
        w_bufs = 3 if (stream_weights and _VMEM_CAP >= 96 * 2**20) else 2

    n_pad = _round_up(n, tm_eff)
    n_row_tiles = n_pad // tm_eff
    grid = (n_row_tiles, num_k)

    # ---------------- operand prep ----------------
    x2d = x.reshape(n, d_model)                    # stays f32; cast to bf16 in-kernel
    if n_pad != n:
        x2d = jnp.pad(x2d, ((0, n_pad - n), (0, 0)))
    if dff_pad != dff:
        # Zero-pad dff: gelu(0 + 0) = 0 and the padded W2 rows are zero -> no effect.
        w1 = jnp.pad(w1, ((0, 0), (0, dff_pad - dff)))
        b1 = jnp.pad(b1, ((0, dff_pad - dff),))
        w2 = jnp.pad(w2, ((0, dff_pad - dff), (0, 0)))
    w1c = w1 if w1.dtype == jnp.bfloat16 else w1.astype(jnp.bfloat16)
    w2c = w2 if w2.dtype == jnp.bfloat16 else w2.astype(jnp.bfloat16)
    b1_2d = b1.reshape(1, dff_pad).astype(jnp.float32)
    b2_2d = b2.reshape(1, d_model).astype(jnp.float32)

    # ---------------- cost / vmem hints ----------------
    weight_bytes = 2 * d_model * dff_pad * 2       # W1 + W2, bf16
    weight_reads = weight_bytes * (n_row_tiles if stream_weights else 1)
    cost = pl.CostEstimate(
        flops=4 * n_pad * d_model * dff_pad,
        transcendentals=n_pad * dff_pad,
        bytes_accessed=(n_pad * d_model * 4        # x (f32)
                        + weight_reads             # W1/W2, re-streamed per row tile
                        + dff_pad * 4 + d_model * 4
                        + n_pad * d_model * 4),    # out (f32)
    )
    vmem_limit = int(min(max(_VMEM_CAP - (2 << 20), 16 << 20),
                         max(vmem_estimate(tm_eff, tdff_eff, w_bufs) + (4 << 20),
                             32 << 20)))

    out2d = pl.pallas_call(
        mlp_kernel,
        out_shape=jax.ShapeDtypeStruct((n_pad, d_model), jnp.float32),
        grid_spec=pltpu.PrefetchScalarGridSpec(
            num_scalar_prefetch=0,
            grid=grid,
            in_specs=[
                pl.BlockSpec((tm_eff, d_model), lambda i, k: (i, 0)),    # x rows (resident over k)
                _weight_spec((d_model, tdff_eff), lambda i, k: (0, k), w_bufs),  # W1 dff-tile
                pl.BlockSpec((1, tdff_eff), lambda i, k: (0, k)),        # b1 dff-tile
                _weight_spec((tdff_eff, d_model), lambda i, k: (k, 0), w_bufs),  # W2 dff-tile
                pl.BlockSpec((1, d_model), lambda i, k: (0, 0)),         # b2
            ],
            out_specs=pl.BlockSpec((tm_eff, d_model), lambda i, k: (i, 0)),
        ),
        compiler_params=pltpu.CompilerParams(
            dimension_semantics=("parallel", "arbitrary"),
            vmem_limit_bytes=vmem_limit,
        ),
        cost_estimate=cost,
    )(x2d, w1c, b1_2d, w2c, b2_2d)

    out2d = out2d[:n]
    return out2d.reshape(batch, seq, d_model)


def init_linear_params(key, in_features, out_features, dtype=jnp.float32):
    """Deterministic init matching nn.Linear's uniform(-1/sqrt(in), 1/sqrt(in)).
    Returns weight already transposed to (in, out)."""
    kw, kb = jax.random.split(key)
    bound = 1.0 / jnp.sqrt(jnp.asarray(in_features, dtype))
    w = jax.random.uniform(kw, (in_features, out_features), dtype, -bound, bound)
    b = jax.random.uniform(kb, (out_features,), dtype, -bound, bound)
    return w, b


if __name__ == "__main__":
    # Small shapes consistent with the module: batch=2, seq=8, d_model=128, dff=256.
    batch, seq, d_model, dff = 2, 8, 128, 256

    key = jax.random.PRNGKey(0)
    kx, k1, k2 = jax.random.split(key, 3)

    x = jax.random.normal(kx, (batch, seq, d_model), jnp.float32)
    w1, b1 = init_linear_params(k1, d_model, dff)      # c_fc
    w2, b2 = init_linear_params(k2, dff, d_model)      # c_proj

    # Cast weights to bf16 once (persistent compute-dtype params; not per forward call).
    w1_bf16 = w1.astype(jnp.bfloat16)
    w2_bf16 = w2.astype(jnp.bfloat16)

    out = mlp_forward(x, w1_bf16, b1, w2_bf16, b2)
    out = jax.block_until_ready(out)

    # Reference with matching numerics (bf16 MXU operands, f32 accumulation, tanh-GELU).
    xb = x.reshape(-1, d_model).astype(jnp.bfloat16)
    h = jnp.dot(xb, w1_bf16, preferred_element_type=jnp.float32) + b1
    h = jax.nn.gelu(h, approximate=True)
    ref = jnp.dot(h.astype(jnp.bfloat16), w2_bf16,
                  preferred_element_type=jnp.float32) + b2
    ref = ref.reshape(batch, seq, d_model)

    assert out.shape == (batch, seq, d_model)
    assert out.dtype == jnp.float32
    assert jnp.allclose(out, ref, atol=2e-3, rtol=2e-3), float(jnp.max(jnp.abs(out - ref)))

    print("KERNEL_OK")
</pallas_src>

<mosaic_0001>
module attributes {stable_mosaic.version = 11 : i64} {
  func.func @mlp_kernel(%arg0: i32, %arg1: i32, %arg2: memref<16x128xf32, #tpu.memory_space<vmem>>, %arg3: memref<128x256xbf16, #tpu.memory_space<vmem>>, %arg4: memref<1x256xf32, #tpu.memory_space<vmem>>, %arg5: memref<256x128xbf16, #tpu.memory_space<vmem>>, %arg6: memref<1x128xf32, #tpu.memory_space<vmem>>, %arg7: memref<16x128xf32, #tpu.memory_space<vmem>>) attributes {dimension_semantics = [#tpu.dimension_semantics<parallel>, #tpu.dimension_semantics<arbitrary>], iteration_bounds = array<i64: 1, 1>, scalar_prefetch = 0 : i64, scratch_operands = 0 : i64, tpu.core_type = #tpu.core_type<tc>, window_params = [{transform_indices = @transform_0, window_bounds = array<i64: 16, 128>}, {transform_indices = @transform_1, window_bounds = array<i64: 128, 256>}, {transform_indices = @transform_2, window_bounds = array<i64: 1, 256>}, {transform_indices = @transform_3, window_bounds = array<i64: 256, 128>}, {pipeline_mode = #tpu.pipeline_mode<synchronous>, transform_indices = @transform_4, window_bounds = array<i64: 1, 128>}, {transform_indices = @transform_5, window_bounds = array<i64: 16, 128>}]} {
    %c0_i32 = arith.constant 0 : i32
    %0 = arith.cmpi eq, %arg1, %c0_i32 : i32
    %1 = arith.extui %0 : i1 to i32
    %c0_i32_0 = arith.constant 0 : i32
    %2 = arith.cmpi ne, %1, %c0_i32_0 : i32
    scf.if %2 {
      %cst_19 = arith.constant 0.000000e+00 : f32
      %32 = vector.broadcast %cst_19 : f32 to vector<16x128xf32>
      %c0_20 = arith.constant 0 : index
      %c0_21 = arith.constant 0 : index
      %33 = vector.load %arg7[%c0_20, %c0_21] : memref<16x128xf32, #tpu.memory_space<vmem>>, vector<16x128xf32>
      tpu.vector_store %arg7[%c0_20, %c0_21], %32 {strides = array<i32>} : memref<16x128xf32, #tpu.memory_space<vmem>>, vector<16x128xf32>,
    } else {
    }
    %c0 = arith.constant 0 : index
    %c0_1 = arith.constant 0 : index
    %3 = vector.load %arg2[%c0, %c0_1] : memref<16x128xf32, #tpu.memory_space<vmem>>, vector<16x128xf32>
    %4 = arith.truncf %3 : vector<16x128xf32> to vector<16x128xbf16>
    %c0_2 = arith.constant 0 : index
    %c0_3 = arith.constant 0 : index
    %5 = vector.load %arg3[%c0_2, %c0_3] : memref<128x256xbf16, #tpu.memory_space<vmem>>, vector<128x256xbf16>
    %cst = arith.constant dense<0.000000e+00> : vector<16x256xf32>
    %6 = tpu.matmul %4, %5, %cst {dimension_numbers = #tpu.dot_dimension_numbers<[1], [0], [0], [1], [0, 0, 1, 1], [], []>} : vector<16x128xbf16>, vector<128x256xbf16>, vector<16x256xf32> -> vector<16x256xf32>
    %c0_4 = arith.constant 0 : index
    %c0_5 = arith.constant 0 : index
    %7 = vector.load %arg4[%c0_4, %c0_5] : memref<1x256xf32, #tpu.memory_space<vmem>>, vector<1x256xf32>
    %8 = vector.broadcast %7 : vector<1x256xf32> to vector<16x256xf32>
    %9 = arith.addf %6, %8 : vector<16x256xf32>
    %10 = arith.mulf %9, %9 : vector<16x256xf32>
    %11 = arith.mulf %9, %10 : vector<16x256xf32>
    %cst_6 = arith.constant 4.471500e-02 : f32
    %12 = vector.broadcast %cst_6 : f32 to vector<16x256xf32>
    %13 = arith.mulf %12, %11 : vector<16x256xf32>
    %14 = arith.addf %9, %13 : vector<16x256xf32>
    %cst_7 = arith.constant 0.797884583 : f32
    %15 = vector.broadcast %cst_7 : f32 to vector<16x256xf32>
    %16 = arith.mulf %15, %14 : vector<16x256xf32>
    %17 = math.tanh %16 : vector<16x256xf32>
    %cst_8 = arith.constant 1.000000e+00 : f32
    %18 = vector.broadcast %cst_8 : f32 to vector<16x256xf32>
    %19 = arith.addf %18, %17 : vector<16x256xf32>
    %cst_9 = arith.constant 5.000000e-01 : f32
    %20 = vector.broadcast %cst_9 : f32 to vector<16x256xf32>
    %21 = arith.mulf %20, %19 : vector<16x256xf32>
    %22 = arith.mulf %9, %21 : vector<16x256xf32>
    %c0_10 = arith.constant 0 : index
    %c0_11 = arith.constant 0 : index
    %23 = vector.load %arg7[%c0_10, %c0_11] : memref<16x128xf32, #tpu.memory_space<vmem>>, vector<16x128xf32>
    %24 = arith.truncf %22 : vector<16x256xf32> to vector<16x256xbf16>
    %c0_12 = arith.constant 0 : index
    %c0_13 = arith.constant 0 : index
    %25 = vector.load %arg5[%c0_12, %c0_13] : memref<256x128xbf16, #tpu.memory_space<vmem>>, vector<256x128xbf16>
    %cst_14 = arith.constant dense<0.000000e+00> : vector<16x128xf32>
    %26 = tpu.matmul %24, %25, %cst_14 {dimension_numbers = #tpu.dot_dimension_numbers<[1], [0], [0], [1], [0, 0, 1, 1], [], []>} : vector<16x256xbf16>, vector<256x128xbf16>, vector<16x128xf32> -> vector<16x128xf32>
    %27 = arith.addf %23, %26 : vector<16x128xf32>
    %c0_15 = arith.constant 0 : index
    %c0_16 = arith.constant 0 : index
    %28 = vector.load %arg7[%c0_15, %c0_16] : memref<16x128xf32, #tpu.memory_space<vmem>>, vector<16x128xf32>
    tpu.vector_store %arg7[%c0_15, %c0_16], %27 {strides = array<i32>} : memref<16x128xf32, #tpu.memory_space<vmem>>, vector<16x128xf32>,
    %c0_i32_17 = arith.constant 0 : i32
    %29 = arith.cmpi eq, %arg1, %c0_i32_17 : i32
    %30 = arith.extui %29 : i1 to i32
    %c0_i32_18 = arith.constant 0 : i32
    %31 = arith.cmpi ne, %30, %c0_i32_18 : i32
    scf.if %31 {
      %c0_19 = arith.constant 0 : index
      %c0_20 = arith.constant 0 : index
      %32 = vector.load %arg7[%c0_19, %c0_20] : memref<16x128xf32, #tpu.memory_space<vmem>>, vector<16x128xf32>
      %c0_21 = arith.constant 0 : index
      %c0_22 = arith.constant 0 : index
      %33 = vector.load %arg6[%c0_21, %c0_22] : memref<1x128xf32, #tpu.memory_space<vmem>>, vector<1x128xf32>
      %34 = vector.broadcast %33 : vector<1x128xf32> to vector<16x128xf32>
      %35 = arith.addf %32, %34 : vector<16x128xf32>
      %c0_23 = arith.constant 0 : index
      %c0_24 = arith.constant 0 : index
      %36 = vector.load %arg7[%c0_23, %c0_24] : memref<16x128xf32, #tpu.memory_space<vmem>>, vector<16x128xf32>
      tpu.vector_store %arg7[%c0_23, %c0_24], %35 {strides = array<i32>} : memref<16x128xf32, #tpu.memory_space<vmem>>, vector<16x128xf32>,
    } else {
    }
    return
  }
  func.func @transform_0(%arg0: i32, %arg1: i32) -> (i32, i32) {
    %c0_i32 = arith.constant 0 : i32
    %c0_i32_0 = arith.constant 0 : i32
    return %arg0, %c0_i32 : i32, i32
  }
  func.func @transform_1(%arg0: i32, %arg1: i32) -> (i32, i32) {
    %c0_i32 = arith.constant 0 : i32
    %c0_i32_0 = arith.constant 0 : i32
    return %c0_i32, %arg1 : i32, i32
  }
  func.func @transform_2(%arg0: i32, %arg1: i32) -> (i32, i32) {
    %c0_i32 = arith.constant 0 : i32
    %c0_i32_0 = arith.constant 0 : i32
    return %c0_i32, %arg1 : i32, i32
  }
  func.func @transform_3(%arg0: i32, %arg1: i32) -> (i32, i32) {
    %c0_i32 = arith.constant 0 : i32
    %c0_i32_0 = arith.constant 0 : i32
    return %arg1, %c0_i32 : i32, i32
  }
  func.func @transform_4(%arg0: i32, %arg1: i32) -> (i32, i32) {
    %c0_i32 = arith.constant 0 : i32
    %c0_i32_0 = arith.constant 0 : i32
    %c0_i32_1 = arith.constant 0 : i32
    return %c0_i32, %c0_i32_0 : i32, i32
  }
  func.func @transform_5(%arg0: i32, %arg1: i32) -> (i32, i32) {
    %c0_i32 = arith.constant 0 : i32
    %c0_i32_0 = arith.constant 0 : i32
    return %arg0, %c0_i32 : i32, i32
  }
}

</mosaic_0001>

<llo_original>
// kernel: mlp_forward.1
$region0: #{mlp_forward.1}
  #allocation0 [shape = 'u32[]', space=smem, size = 0x4, offset = 0x4, fixed_abs, tag = 'smem constant byte address 0x4 - core index']
  #allocation1 [shape = 'u32[144,128]{1,0:T(1,128)}', space=vmem, size = 0x12000, scoped, tag = 'internal scratch']
  %s0 = inlined_call_operand.hbm [shape: f32[16,128], index: 0, kind: input, shape index: {}]
  %s1 = inlined_call_operand.hbm [shape: bf16[128,256], index: 1, kind: input, shape index: {}]
  %s2 = inlined_call_operand.vmem [shape: f32[1,256], index: 2, kind: input, shape index: {}]
  %s3 = inlined_call_operand.hbm [shape: bf16[256,128], index: 3, kind: input, shape index: {}]
  %s4 = inlined_call_operand.vmem [shape: f32[1,128], index: 4, kind: input, shape index: {}]
  %s5 = inlined_call_operand.hbm [shape: f32[16,128], index: 5, kind: output, shape index: {}]
  %s6 = sld [smem:[#allocation0]]
  $region50: #{mlp_forward.1} parent=0
    _
  %s8 = ssub.s32 1, %s6
  %s9 = scalar_select 0, %s8, %s6
  $region1: #{mlp_forward.1} parent=0
    #allocation2 [shape = 'u8[8192]{0}', space=vmem, size = 0x2000, scoped, tag = 'input window, operand 0, single buffered']
    #allocation3 [shape = 's32[1]{0}', space=sflag, size = 0x4, scoped, tag = 'scoped memory for mlp_forward.1']
    #allocation4 [shape = 's32[1]{0}', space=sflag, size = 0x4, scoped, tag = 'scoped memory for mlp_forward.1']
    #allocation5 [shape = 'u8[65536]{0}', space=vmem, size = 0x10000, scoped, tag = 'input window, operand 1, single buffered']
    #allocation6 [shape = 's32[1]{0}', space=sflag, size = 0x4, scoped, tag = 'scoped memory for mlp_forward.1']
    #allocation7 [shape = 'u8[65536]{0}', space=vmem, size = 0x10000, scoped, tag = 'input window, operand 3, single buffered']
    #allocation8 [shape = 'u8[8192]{0}', space=vmem, size = 0x2000, scoped, tag = 'output window, operand 0, single buffered']
    %10 = vsyncpa [#allocation3], 0
    %11 = vsyncpa [#allocation6], 0
    %12 = vsyncpa [#allocation4], 0
    // Predicated region
    $region2: #{mlp_forward.1} parent=1 // pred_check
      _
    $region3: #{mlp_forward.1} parent=1 // pred_check_branch
      %14 = sbr.rel (0) target = $region5
    $region4: #{mlp_forward.1} parent=1 // pred_region
      %s16 = ssub.s32 256, 256
      %17 = vsyncadd [#allocation3], %s16
      %s18 = sshll.u32 [#allocation2], 4
      %s19 = int_to_ptr.vmem [resolvable:$true] %s18
      %24 = dma.hbm_to_vmem [thread:$0]  %s0, 256, %s19, [#allocation3], 128, 128, 8
    $region5: #{mlp_forward.1} parent=1 // pred_fallthru
      _
    // Predicated region
    $region6: #{mlp_forward.1} parent=1 // pred_check
      _
    $region7: #{mlp_forward.1} parent=1 // pred_check_branch
      %26 = sbr.rel (0) target = $region9
    $region8: #{mlp_forward.1} parent=1 // pred_region
      %s28 = ssub.s32 2048, 2048
      %29 = vsyncadd [#allocation6], %s28
      %s30 = sshll.u32 [#allocation5], 4
      %s31 = int_to_ptr.vmem [resolvable:$true] %s30
      %36 = dma.hbm_to_vmem [thread:$0]  %s1, 2048, %s31, [#allocation6], 128, 128, 8
    $region9: #{mlp_forward.1} parent=1 // pred_fallthru
      _
    // Predicated region
    $region10: #{mlp_forward.1} parent=1 // pred_check
      _
    $region11: #{mlp_forward.1} parent=1 // pred_check_branch
      %38 = sbr.rel (0) target = $region13
    $region12: #{mlp_forward.1} parent=1 // pred_region
      _
    $region13: #{mlp_forward.1} parent=1 // pred_fallthru
      _
    // Predicated region
    $region14: #{mlp_forward.1} parent=1 // pred_check
      _
    $region15: #{mlp_forward.1} parent=1 // pred_check_branch
      %40 = sbr.rel (0) target = $region17
    $region16: #{mlp_forward.1} parent=1 // pred_region
      %s42 = ssub.s32 2048, 2048
      %43 = vsyncadd [#allocation6], %s42
      %s44 = sshll.u32 [#allocation7], 4
      %s45 = int_to_ptr.vmem [resolvable:$true] %s44
      %50 = dma.hbm_to_vmem [thread:$0]  %s3, 2048, %s45, [#allocation6], 64, 64, 4
    $region17: #{mlp_forward.1} parent=1 // pred_fallthru
      _
    // Predicated region
    $region18: #{mlp_forward.1} parent=1 // pred_check
      _
    $region19: #{mlp_forward.1} parent=1 // pred_check_branch
      %52 = sbr.rel (0) target = $region21
    $region20: #{mlp_forward.1} parent=1 // pred_region
      _
    $region21: #{mlp_forward.1} parent=1 // pred_fallthru
      _
    // Predicated region
    $region22: #{mlp_forward.1} parent=1 // pred_check
      _
    $region23: #{mlp_forward.1} parent=1 // pred_check_branch
      %54 = sbr.rel (0) target = $region25
    $region24: #{mlp_forward.1} parent=1 // pred_region
      %55 = dma.done [#allocation3], 256
    $region25: #{mlp_forward.1} parent=1 // pred_fallthru
      _
    // Predicated region
    $region26: #{mlp_forward.1} parent=1 // pred_check
      _
    $region27: #{mlp_forward.1} parent=1 // pred_check_branch
      %57 = sbr.rel (0) target = $region29
    $region28: #{mlp_forward.1} parent=1 // pred_region
      %58 = dma.done [#allocation6], 2048
    $region29: #{mlp_forward.1} parent=1 // pred_fallthru
      _
    // Predicated region
    $region30: #{mlp_forward.1} parent=1 // pred_check
      _
    $region31: #{mlp_forward.1} parent=1 // pred_check_branch
      %60 = sbr.rel (0) target = $region33
    $region32: #{mlp_forward.1} parent=1 // pred_region
      %61 = dma.done [#allocation6], 2048
    $region33: #{mlp_forward.1} parent=1 // pred_fallthru
      _
    %p63 = scmp.eq.s32.totalorder 0, 0
    // Predicated region
    $region34: #{mlp_forward.1} parent=1 // pred_check
      %p64 = pneg %p63
    $region35: #{mlp_forward.1} parent=1 // pred_check_branch
      %66 = sbr.rel (%p64) target = $region37
    $region36: #{mlp_forward.1} parent=1 // pred_region
      %67 = vst [vmem:[#allocation8] sm:$0xff] 0.0
      %68 = vst [vmem:[#allocation8 + $0x8] sm:$0xff] 0.0
    $region37: #{mlp_forward.1} parent=1 // pred_fallthru
      _
    %v69 = vld [vmem:[#allocation2] sm:$0xff]
    %v70 = vld [vmem:[#allocation2 + $0x8] sm:$0xff]
    %v71 = vpack.c.bf16 %v70, %v69
    %v72 = vld [vmem:[#allocation5] sm:$0xff]
    %v73 = vld [vmem:[#allocation5 + $0x8] sm:$0xff]
    %v74 = vld [vmem:[#allocation5 + $0x10] sm:$0xff]
    %v75 = vld [vmem:[#allocation5 + $0x18] sm:$0xff]
    %v76 = vld [vmem:[#allocation5 + $0x20] sm:$0xff]
    %v77 = vld [vmem:[#allocation5 + $0x28] sm:$0xff]
    %v78 = vld [vmem:[#allocation5 + $0x30] sm:$0xff]
    %v79 = vld [vmem:[#allocation5 + $0x38] sm:$0xff]
    %v80 = vld [vmem:[#allocation5 + $0x40] sm:$0xff]
    %v81 = vld [vmem:[#allocation5 + $0x48] sm:$0xff]
    %v82 = vld [vmem:[#allocation5 + $0x50] sm:$0xff]
    %v83 = vld [vmem:[#allocation5 + $0x58] sm:$0xff]
    %v84 = vld [vmem:[#allocation5 + $0x60] sm:$0xff]
    %v85 = vld [vmem:[#allocation5 + $0x68] sm:$0xff]
    %v86 = vld [vmem:[#allocation5 + $0x70] sm:$0xff]
    %v87 = vld [vmem:[#allocation5 + $0x78] sm:$0xff]
    %v88 = vld [vmem:[%s2] sm:$0x3]
    %v90 = vlaneseq
    %v91 = vshrl.u32 %v90, 7
    %v92 = vsub.s32 0, %v91
    %v93 = vrot.slane %v88, %v92
    %v94 = vlaneseq
    %v95 = vshrl.u32 %v94, 7
    %v96 = vsub.s32 1, %v95
    %v97 = vrot.slane %v88, %v96
    %v116 = vunpack.c.l.b16 %v72
    %v117 = vunpack.c.h.b16 %v72
    %v118 = vunpack.c.l.b16 %v73
    %v119 = vunpack.c.h.b16 %v73
    %v120 = vunpack.c.l.b16 %v74
    %v121 = vunpack.c.h.b16 %v74
    %v122 = vunpack.c.l.b16 %v75
    %v123 = vunpack.c.h.b16 %v75
    %v124 = vunpack.c.l.b16 %v76
    %v125 = vunpack.c.h.b16 %v76
    %v126 = vunpack.c.l.b16 %v77
    %v127 = vunpack.c.h.b16 %v77
    %v128 = vunpack.c.l.b16 %v78
    %v129 = vunpack.c.h.b16 %v78
    %v130 = vunpack.c.l.b16 %v79
    %v131 = vunpack.c.h.b16 %v79
    %v132 = vunpack.c.l.b16 %v80
    %v133 = vunpack.c.h.b16 %v80
    %v134 = vunpack.c.l.b16 %v81
    %v135 = vunpack.c.h.b16 %v81
    %v136 = vunpack.c.l.b16 %v82
    %v137 = vunpack.c.h.b16 %v82
    %v138 = vunpack.c.l.b16 %v83
    %v139 = vunpack.c.h.b16 %v83
    %v140 = vunpack.c.l.b16 %v84
    %v141 = vunpack.c.h.b16 %v84
    %v142 = vunpack.c.l.b16 %v85
    %v143 = vunpack.c.h.b16 %v85
    %v144 = vunpack.c.l.b16 %v86
    %v145 = vunpack.c.h.b16 %v86
    %v146 = vunpack.c.l.b16 %v87
    %v147 = vunpack.c.h.b16 %v87
    %v148 = vpack.c.b16 %v118, %v116
    %v149 = vpack.c.b16 %v119, %v117
    %v150 = vpack.c.b16 %v122, %v120
    %v151 = vpack.c.b16 %v123, %v121
    %v152 = vpack.c.b16 %v126, %v124
    %v153 = vpack.c.b16 %v127, %v125
    %v154 = vpack.c.b16 %v130, %v128
    %v155 = vpack.c.b16 %v131, %v129
    %v156 = vpack.c.b16 %v134, %v132
    %v157 = vpack.c.b16 %v135, %v133
    %v158 = vpack.c.b16 %v138, %v136
    %v159 = vpack.c.b16 %v139, %v137
    %v160 = vpack.c.b16 %v142, %v140
    %v161 = vpack.c.b16 %v143, %v141
    %v162 = vpack.c.b16 %v146, %v144
    %v163 = vpack.c.b16 %v147, %v145
    %180 = vmatprep.subr.bf16.mxu0 %v163
    %181 = vmatpush1.bf16.msra.mxu0 %v162
    %182 = vmatprep.subr.bf16.mxu0 %v161
    %183 = vmatpush1.bf16.msra.mxu0 %v160
    %184 = vmatprep.subr.bf16.mxu0 %v159
    %185 = vmatpush1.bf16.msra.mxu0 %v158
    %186 = vmatprep.subr.bf16.mxu0 %v157
    %187 = vmatpush1.bf16.msra.mxu0 %v156
    %188 = vmatprep.subr.bf16.mxu0 %v155
    %189 = vmatpush1.bf16.msra.mxu0 %v154
    %190 = vmatprep.subr.bf16.mxu0 %v153
    %191 = vmatpush1.bf16.msra.mxu0 %v152
    %192 = vmatprep.subr.bf16.mxu0 %v151
    %193 = vmatpush1.bf16.msra.mxu0 %v150
    %194 = vmatprep.subr.bf16.mxu0 %v149
    %195 = vmatpush1.bf16.msra.mxu0 %v148
    %196 = vmatprep.subr.bf16.mxu0 0
    %197 = vmatpush2.bf16.msra.mxu0 0
    %198 = vmatprep.subr.bf16.mxu0 0
    %199 = vmatpush2.bf16.msra.mxu0 0
    %200 = vmatprep.subr.bf16.mxu0 0
    %201 = vmatpush2.bf16.msra.mxu0 0
    %202 = vmatprep.subr.bf16.mxu0 0
    %203 = vmatpush2.bf16.msra.mxu0 0
    %204 = vmatprep.subr.bf16.mxu0 0
    %205 = vmatpush2.bf16.msra.mxu0 0
    %206 = vmatprep.subr.bf16.mxu0 0
    %207 = vmatpush2.bf16.msra.mxu0 0
    %208 = vmatprep.subr.bf16.mxu0 0
    %209 = vmatpush2.bf16.msra.mxu0 0
    %210 = vmatprep.subr.bf16.mxu0 0
    %211 = vmatpush2.bf16.msra.mxu0 0
    %212 = vmatprep.mubr.bf16.mxu0 0
    %213 = vmatmul.mubr.bf16.gmra.mxu0 %v71
    %v214 = vpop.f32.mrf.mxu0
    %v215 = vadd.f32 %v93, %v214
    %v216 = vpop.f32.mrf.mxu0
    %v217 = vadd.f32 %v97, %v216
    %v218 = vpop.f32.mrf.mxu0
    %v219 = vadd.f32 %v93, %v218
    %v220 = vpop.f32.mrf.mxu0
    %v221 = vadd.f32 %v97, %v220
    %222 = vdwg.mxu0
    %v223 = vmul.f32 %v215, %v215
    %v224 = vmul.f32 %v217, %v217
    %v225 = vmul.f32 %v219, %v219
    %v226 = vmul.f32 %v221, %v221
    %v227 = vmul.f32 %v215, %v223
    %v228 = vmul.f32 %v217, %v224
    %v229 = vmul.f32 %v219, %v225
    %v230 = vmul.f32 %v221, %v226
    %v231 = vmul.f32 %v227, 0.044715
    %v232 = vmul.f32 %v228, 0.044715
    %v233 = vmul.f32 %v229, 0.044715
    %v234 = vmul.f32 %v230, 0.044715
    %v235 = vadd.f32 %v215, %v231
    %v236 = vadd.f32 %v217, %v232
    %v237 = vadd.f32 %v219, %v233
    %v238 = vadd.f32 %v221, %v234
    %v239 = vmul.f32 %v235, 0.7978846
    %v240 = vmul.f32 %v236, 0.7978846
    %v241 = vmul.f32 %v237, 0.7978846
    %v242 = vmul.f32 %v238, 0.7978846
    %v243 = vtanh.pop %v239
    %v244 = vtanh.pop %v240
    %v245 = vtanh.pop %v241
    %v246 = vtanh.pop %v242
    %v247 = vadd.f32 %v243, 1.0
    %v248 = vadd.f32 %v244, 1.0
    %v249 = vadd.f32 %v245, 1.0
    %v250 = vadd.f32 %v246, 1.0
    %v251 = vmul.f32 %v247, 0.5
    %v252 = vmul.f32 %v248, 0.5
    %v253 = vmul.f32 %v249, 0.5
    %v254 = vmul.f32 %v250, 0.5
    %v255 = vmul.f32 %v215, %v251
    %v256 = vmul.f32 %v217, %v252
    %v257 = vmul.f32 %v219, %v253
    %v258 = vmul.f32 %v221, %v254
    %v259 = vld [vmem:[#allocation8] sm:$0xff]
    %v260 = vld [vmem:[#allocation8 + $0x8] sm:$0xff]
    %v261 = vpack.c.bf16 %v257, %v255
    %v262 = vpack.c.bf16 %v258, %v256
    %v263 = vld [vmem:[#allocation7] sm:$0xf]
    %v264 = vld [vmem:[#allocation7 + $0x4] sm:$0xf]
    %v265 = vld [vmem:[#allocation7 + $0x8] sm:$0xf]
    %v266 = vld [vmem:[#allocation7 + $0xc] sm:$0xf]
    %v267 = vld [vmem:[#allocation7 + $0x10] sm:$0xf]
    %v268 = vld [vmem:[#allocation7 + $0x14] sm:$0xf]
    %v269 = vld [vmem:[#allocation7 + $0x18] sm:$0xf]
    %v270 = vld [vmem:[#allocation7 + $0x1c] sm:$0xf]
    %v271 = vld [vmem:[#allocation7 + $0x20] sm:$0xf]
    %v272 = vld [vmem:[#allocation7 + $0x24] sm:$0xf]
    %v273 = vld [vmem:[#allocation7 + $0x28] sm:$0xf]
    %v274 = vld [vmem:[#allocation7 + $0x2c] sm:$0xf]
    %v275 = vld [vmem:[#allocation7 + $0x30] sm:$0xf]
    %v276 = vld [vmem:[#allocation7 + $0x34] sm:$0xf]
    %v277 = vld [vmem:[#allocation7 + $0x38] sm:$0xf]
    %v278 = vld [vmem:[#allocation7 + $0x3c] sm:$0xf]
    %v279 = vld [vmem:[#allocation7 + $0x40] sm:$0xf]
    %v280 = vld [vmem:[#allocation7 + $0x44] sm:$0xf]
    %v281 = vld [vmem:[#allocation7 + $0x48] sm:$0xf]
    %v282 = vld [vmem:[#allocation7 + $0x4c] sm:$0xf]
    %v283 = vld [vmem:[#allocation7 + $0x50] sm:$0xf]
    %v284 = vld [vmem:[#allocation7 + $0x54] sm:$0xf]
    %v285 = vld [vmem:[#allocation7 + $0x58] sm:$0xf]
    %v286 = vld [vmem:[#allocation7 + $0x5c] sm:$0xf]
    %v287 = vld [vmem:[#allocation7 + $0x60] sm:$0xf]
    %v288 = vld [vmem:[#allocation7 + $0x64] sm:$0xf]
    %v289 = vld [vmem:[#allocation7 + $0x68] sm:$0xf]
    %v290 = vld [vmem:[#allocation7 + $0x6c] sm:$0xf]
    %v291 = vld [vmem:[#allocation7 + $0x70] sm:$0xf]
    %v292 = vld [vmem:[#allocation7 + $0x74] sm:$0xf]
    %v293 = vld [vmem:[#allocation7 + $0x78] sm:$0xf]
    %v294 = vld [vmem:[#allocation7 + $0x7c] sm:$0xf]
    %v327 = vunpack.c.l.b16 %v263
    %v328 = vunpack.c.l.b16 %v264
    %v329 = vunpack.c.l.b16 %v265
    %v330 = vunpack.c.l.b16 %v266
    %v331 = vunpack.c.l.b16 %v267
    %v332 = vunpack.c.l.b16 %v268
    %v333 = vunpack.c.l.b16 %v269
    %v334 = vunpack.c.l.b16 %v270
    %v335 = vunpack.c.l.b16 %v271
    %v336 = vunpack.c.l.b16 %v272
    %v337 = vunpack.c.l.b16 %v273
    %v338 = vunpack.c.l.b16 %v274
    %v339 = vunpack.c.l.b16 %v275
    %v340 = vunpack.c.l.b16 %v276
    %v341 = vunpack.c.l.b16 %v277
    %v342 = vunpack.c.l.b16 %v278
    %v343 = vunpack.c.l.b16 %v279
    %v344 = vunpack.c.l.b16 %v280
    %v345 = vunpack.c.l.b16 %v281
    %v346 = vunpack.c.l.b16 %v282
    %v347 = vunpack.c.l.b16 %v283
    %v348 = vunpack.c.l.b16 %v284
    %v349 = vunpack.c.l.b16 %v285
    %v350 = vunpack.c.l.b16 %v286
    %v351 = vunpack.c.l.b16 %v287
    %v352 = vunpack.c.l.b16 %v288
    %v353 = vunpack.c.l.b16 %v289
    %v354 = vunpack.c.l.b16 %v290
    %v355 = vunpack.c.l.b16 %v291
    %v356 = vunpack.c.l.b16 %v292
    %v357 = vunpack.c.l.b16 %v293
    %v358 = vunpack.c.l.b16 %v294
    %v359 = vpack.c.b16 %v328, %v327
    %v360 = vpack.c.b16 %v330, %v329
    %v361 = vpack.c.b16 %v332, %v331
    %v362 = vpack.c.b16 %v334, %v333
    %v363 = vpack.c.b16 %v336, %v335
    %v364 = vpack.c.b16 %v338, %v337
    %v365 = vpack.c.b16 %v340, %v339
    %v366 = vpack.c.b16 %v342, %v341
    %v367 = vpack.c.b16 %v344, %v343
    %v368 = vpack.c.b16 %v346, %v345
    %v369 = vpack.c.b16 %v348, %v347
    %v370 = vpack.c.b16 %v350, %v349
    %v371 = vpack.c.b16 %v352, %v351
    %v372 = vpack.c.b16 %v354, %v353
    %v373 = vpack.c.b16 %v356, %v355
    %v374 = vpack.c.b16 %v358, %v357
    %391 = vmatprep.subr.bf16.mxu0 0
    %392 = vmatpush1.bf16.msra.mxu0 %v366
    %393 = vmatprep.subr.bf16.mxu0 0
    %394 = vmatpush1.bf16.msra.mxu0 %v365
    %395 = vmatprep.subr.bf16.mxu0 0
    %396 = vmatpush1.bf16.msra.mxu0 %v364
    %397 = vmatprep.subr.bf16.mxu0 0
    %398 = vmatpush1.bf16.msra.mxu0 %v363
    %399 = vmatprep.subr.bf16.mxu0 0
    %400 = vmatpush1.bf16.msra.mxu0 %v362
    %401 = vmatprep.subr.bf16.mxu0 0
    %402 = vmatpush1.bf16.msra.mxu0 %v361
    %403 = vmatprep.subr.bf16.mxu0 0
    %404 = vmatpush1.bf16.msra.mxu0 %v360
    %405 = vmatprep.subr.bf16.mxu0 0
    %406 = vmatpush1.bf16.msra.mxu0 %v359
    %407 = vmatprep.subr.bf16.mxu0 0
    %408 = vmatpush2.bf16.msra.mxu0 %v374
    %409 = vmatprep.subr.bf16.mxu0 0
    %410 = vmatpush2.bf16.msra.mxu0 %v373
    %411 = vmatprep.subr.bf16.mxu0 0
    %412 = vmatpush2.bf16.msra.mxu0 %v372
    %413 = vmatprep.subr.bf16.mxu0 0
    %414 = vmatpush2.bf16.msra.mxu0 %v371
    %415 = vmatprep.subr.bf16.mxu0 0
    %416 = vmatpush2.bf16.msra.mxu0 %v370
    %417 = vmatprep.subr.bf16.mxu0 0
    %418 = vmatpush2.bf16.msra.mxu0 %v369
    %419 = vmatprep.subr.bf16.mxu0 0
    %420 = vmatpush2.bf16.msra.mxu0 %v368
    %421 = vmatprep.subr.bf16.mxu0 0
    %422 = vmatpush2.bf16.msra.mxu0 %v367
    %423 = vmatprep.mubr.bf16.mxu0 %v262
    %424 = vmatmul.mubr.bf16.gmra.mxu0 %v261
    %v425 = vpop.f32.mrf.mxu0
    %v426 = vadd.f32 0.0, %v425
    %v427 = vpop.f32.mrf.mxu0
    %v428 = vpop.f32.mrf.mxu0
    %v429 = vadd.f32 0.0, %v428
    %v430 = vpop.f32.mrf.mxu0
    %431 = vdwg.mxu0
    %v432 = vadd.f32 %v259, %v426
    %v433 = vadd.f32 %v260, %v429
    %434 = vst [vmem:[#allocation8] sm:$0xff] %v432
    %435 = vst [vmem:[#allocation8 + $0x8] sm:$0xff] %v433
    // Predicated region
    $region38: #{mlp_forward.1} parent=1 // pred_check
      %p436 = pneg %p63
    $region39: #{mlp_forward.1} parent=1 // pred_check_branch
      %438 = sbr.rel (%p436) target = $region41
    $region40: #{mlp_forward.1} parent=1 // pred_region
      %v439 = vld [vmem:[#allocation8] sm:$0xff]
      %v440 = vld [vmem:[#allocation8 + $0x8] sm:$0xff]
      %v441 = vld [vmem:[%s4] sm:$0x1]
      %v443 = vlaneseq
      %v444 = vshrl.u32 %v443, 7
      %v445 = vsub.s32 0, %v444
      %v446 = vrot.slane %v441, %v445
      %v448 = vadd.f32 %v439, %v446
      %v449 = vadd.f32 %v440, %v446
      %450 = vst [vmem:[#allocation8] sm:$0xff] %v448
      %451 = vst [vmem:[#allocation8 + $0x8] sm:$0xff] %v449
    $region41: #{mlp_forward.1} parent=1 // pred_fallthru
      _
    // Predicated region
    $region42: #{mlp_forward.1} parent=1 // pred_check
      _
    $region43: #{mlp_forward.1} parent=1 // pred_check_branch
      %453 = sbr.rel (0) target = $region45
    $region44: #{mlp_forward.1} parent=1 // pred_region
      %s455 = ssub.s32 256, 256
      %456 = vsyncadd [#allocation4], %s455
      %s457 = sshll.u32 [#allocation8], 4
      %s458 = int_to_ptr.vmem [resolvable:$true] %s457
      %463 = dma.vmem_to_hbm [thread:$0]  %s458, 256, %s5, [#allocation4], 128, 128, 8
    $region45: #{mlp_forward.1} parent=1 // pred_fallthru
      _
    // Predicated region
    $region46: #{mlp_forward.1} parent=1 // pred_check
      _
    $region47: #{mlp_forward.1} parent=1 // pred_check_branch
      %465 = sbr.rel (0) target = $region49
    $region48: #{mlp_forward.1} parent=1 // pred_region
      %466 = dma.done [#allocation4], 256
    $region49: #{mlp_forward.1} parent=1 // pred_fallthru
      _
    %467 = vsyncpa [#allocation3], 1
    %468 = vsyncpa [#allocation6], 1
    %469 = vsyncpa [#allocation4], 1

</llo_original>
